<compile_context>
chip_gen: v5e
topology: v5e:2x2
jax: 0.10.0
libtpu: 0.0.40
codegen_flags: <defaults>
</compile_context>

<pallas_src>
import jax
import jax.numpy as jnp
from jax.experimental import pallas as pl
from jax.experimental.pallas import tpu as pltpu

STATE_SIZE = 4     # CartPole-v1 observation dim
ACTION_SIZE = 2    # CartPole-v1 action dim
HIDDEN = 32
FEAT_PAD = HIDDEN  # layer-0 input features zero-padded 4 -> 32 (uniform K=32 contractions)
OUT_PAD = 8        # final output rows zero-padded 2 -> 8 (aligned, unmasked store)

_LAYER_DIMS = [(STATE_SIZE, HIDDEN)] + [(HIDDEN, HIDDEN)] * 4 + [(HIDDEN, ACTION_SIZE)]


def _round_up(n, m):
    return ((n + m - 1) // m) * m


def _build_layout():
    """Row layout of the packed (TOTAL_ROWS, HIDDEN) parameter buffer.

    Per layer (PyTorch weight layout W: (fan_out, fan_in), bias: (fan_out,)):
      * weight slab:  out_pad rows, cols [0, fan_in)  (rest zero)
      * bias   slab:  out_pad rows, col 0             (rest zero)
    out_pad = round_up(fan_out, 8) so every in-kernel slice starts on a sublane
    boundary and spans the full logical lane width (no sub-tile slices).
    """
    layout = []
    row = 0
    for (fan_in, fan_out) in _LAYER_DIMS:
        out_pad = _round_up(fan_out, 8)
        layout.append((row, out_pad, fan_out, fan_in, row + out_pad))
        row += 2 * out_pad
    return layout, row


_LAYOUT, _TOTAL_ROWS = _build_layout()
_FLOPS_PER_ROW = 2 * sum(fi * fo for fi, fo in _LAYER_DIMS)


def pack_params(params):
    """Pack [(W0, b0), ..., (W5, b5)] (PyTorch (out, in) weights) into one
    (TOTAL_ROWS, HIDDEN) f32 buffer.  Zero padding makes padded contraction
    columns and padded output rows contribute exactly zero."""
    buf = jnp.zeros((_TOTAL_ROWS, HIDDEN), jnp.float32)
    for (w, b), (w_row, _out_pad, fan_out, fan_in, b_row) in zip(params, _LAYOUT):
        buf = buf.at[w_row:w_row + fan_out, :fan_in].set(w.astype(jnp.float32))
        buf = buf.at[b_row:b_row + fan_out, 0].set(b.astype(jnp.float32))
    return buf


def dqn_kernel(x_ref, p_ref, o_ref):
    """Fused 6-layer MLP on one lane-dense (FEAT_PAD, TB) batch tile."""
    h = x_ref[...]                                      # (32, TB) f32, batch on lanes
    n_layers = len(_LAYOUT)
    for li, (w_row, out_pad, _fo, _fi, b_row) in enumerate(_LAYOUT):
        w = p_ref[w_row:w_row + out_pad, :]             # (out_pad, 32), aligned slab
        b = p_ref[b_row:b_row + out_pad, 0:1]           # (out_pad, 1), lane-broadcast in add
        y = jnp.dot(w, h, preferred_element_type=jnp.float32) + b   # (out_pad, TB)
        if li < n_layers - 1:
            h = jnp.maximum(y, 0.0)                      # ReLU, full lane utilization
        else:
            o_ref[...] = y                               # (8, TB); rows 2..7 are exactly zero


def dqn5layers_forward(x, packed_params, *, block_b=1024):
    """x: (B, STATE_SIZE) f32 -> (B, ACTION_SIZE). packed_params = pack_params(...)."""
    assert x.shape[1] == STATE_SIZE
    B = x.shape[0]
    block_b = _round_up(max(block_b, 128), 128)

    # Keep the lane (batch) axis 128-aligned; cap TB at ~half the padded batch so the
    # grid has >= 2 steps when possible (lets "parallel" use both v7x TensorCores).
    b128 = _round_up(B, 128)
    tb = min(block_b, max(128, _round_up(pl.cdiv(b128, 2), 128)))
    b_pad = _round_up(B, tb)
    grid = (b_pad // tb,)

    # Lane-dense transposed + zero-padded input: (FEAT_PAD, B_pad).
    xt = jnp.zeros((FEAT_PAD, b_pad), jnp.float32)
    xt = xt.at[:STATE_SIZE, :B].set(x.T.astype(jnp.float32))

    cost = pl.CostEstimate(
        flops=_FLOPS_PER_ROW * b_pad,
        transcendentals=0,
        bytes_accessed=4 * (FEAT_PAD * b_pad + OUT_PAD * b_pad + _TOTAL_ROWS * HIDDEN),
    )

    out = pl.pallas_call(
        dqn_kernel,
        out_shape=jax.ShapeDtypeStruct((OUT_PAD, b_pad), jnp.float32),
        grid=grid,
        in_specs=[
            pl.BlockSpec((FEAT_PAD, tb), lambda i: (0, i)),            # batch tile
            pl.BlockSpec((_TOTAL_ROWS, HIDDEN), lambda i: (0, 0)),     # VMEM-resident params
        ],
        out_specs=pl.BlockSpec((OUT_PAD, tb), lambda i: (0, i)),       # lane-dense, aligned
        compiler_params=pltpu.CompilerParams(
            dimension_semantics=("parallel",)),                        # 2 TCs on v7x
        cost_estimate=cost,
    )(xt, packed_params)

    # Drop zero-padded rows / batch columns; back to the module's (B, actions) layout.
    return out[:ACTION_SIZE, :B].T


def init_params(key):
    """Deterministic init matching nn.Linear defaults (PyTorch (out, in) layout)."""
    params = []
    for (fan_in, fan_out) in _LAYER_DIMS:
        key, kw, kb = jax.random.split(key, 3)
        bound = 1.0 / jnp.sqrt(float(fan_in))
        w = jax.random.uniform(kw, (fan_out, fan_in), jnp.float32, -bound, bound)
        b = jax.random.uniform(kb, (fan_out,), jnp.float32, -bound, bound)
        params.append((w, b))
    return params


def reference_forward(x, params):
    """Plain-JAX reference of the same math (y = x @ W.T + b, ReLU between layers)."""
    h = x
    for i, (w, b) in enumerate(params):
        h = h @ w.T + b
        if i < len(params) - 1:
            h = jnp.maximum(h, 0.0)
    return h


if __name__ == "__main__":
    key = jax.random.PRNGKey(0)
    key, kx = jax.random.split(key)

    params = init_params(key)
    packed = pack_params(params)

    # Small "acting" batch.
    B = 8
    x = jax.random.normal(kx, (B, STATE_SIZE), jnp.float32)
    out = jax.block_until_ready(dqn5layers_forward(x, packed))
    ref = reference_forward(x, params)
    assert out.shape == (B, ACTION_SIZE)
    assert jnp.allclose(out, ref, atol=1e-4, rtol=1e-5)

    # Replay-buffer-sized, non-multiple-of-128 batch: exercises padding + multi-tile grid.
    key, kx2 = jax.random.split(key)
    B2 = 300
    x2 = jax.random.normal(kx2, (B2, STATE_SIZE), jnp.float32)
    out2 = jax.block_until_ready(dqn5layers_forward(x2, packed, block_b=128))
    ref2 = reference_forward(x2, params)
    assert out2.shape == (B2, ACTION_SIZE)
    assert jnp.allclose(out2, ref2, atol=1e-4, rtol=1e-5)

    print("KERNEL_OK")
</pallas_src>

<mosaic_0001>
module attributes {stable_mosaic.version = 11 : i64} {
  func.func @dqn_kernel(%arg0: i32, %arg1: memref<32x128xf32, #tpu.memory_space<vmem>>, %arg2: memref<336x32xf32, #tpu.memory_space<vmem>>, %arg3: memref<8x128xf32, #tpu.memory_space<vmem>>) attributes {dimension_semantics = [#tpu.dimension_semantics<parallel>], iteration_bounds = array<i64: 1>, scalar_prefetch = 0 : i64, scratch_operands = 0 : i64, tpu.core_type = #tpu.core_type<tc>, window_params = [{transform_indices = @transform_0, window_bounds = array<i64: 32, 128>}, {pipeline_mode = #tpu.pipeline_mode<synchronous>, transform_indices = @transform_1, window_bounds = array<i64: 336, 32>}, {transform_indices = @transform_2, window_bounds = array<i64: 8, 128>}]} {
    %c0 = arith.constant 0 : index
    %c0_0 = arith.constant 0 : index
    %0 = vector.load %arg1[%c0, %c0_0] : memref<32x128xf32, #tpu.memory_space<vmem>>, vector<32x128xf32>
    %c0_1 = arith.constant 0 : index
    %c0_2 = arith.constant 0 : index
    %1 = vector.load %arg2[%c0_1, %c0_2] : memref<336x32xf32, #tpu.memory_space<vmem>>, vector<32x32xf32>
    %c32 = arith.constant 32 : index
    %c0_3 = arith.constant 0 : index
    %2 = vector.load %arg2[%c32, %c0_3] : memref<336x32xf32, #tpu.memory_space<vmem>>, vector<32x1xf32>
    %cst = arith.constant dense<0.000000e+00> : vector<32x128xf32>
    %3 = tpu.matmul %1, %0, %cst {dimension_numbers = #tpu.dot_dimension_numbers<[1], [0], [0], [1], [0, 0, 1, 1], [], []>} : vector<32x32xf32>, vector<32x128xf32>, vector<32x128xf32> -> vector<32x128xf32>
    %4 = vector.broadcast %2 : vector<32x1xf32> to vector<32x128xf32>
    %5 = arith.addf %3, %4 : vector<32x128xf32>
    %cst_4 = arith.constant 0.000000e+00 : f32
    %6 = vector.broadcast %cst_4 : f32 to vector<32x128xf32>
    %7 = arith.maximumf %5, %6 : vector<32x128xf32>
    %c64 = arith.constant 64 : index
    %c0_5 = arith.constant 0 : index
    %8 = vector.load %arg2[%c64, %c0_5] : memref<336x32xf32, #tpu.memory_space<vmem>>, vector<32x32xf32>
    %c96 = arith.constant 96 : index
    %c0_6 = arith.constant 0 : index
    %9 = vector.load %arg2[%c96, %c0_6] : memref<336x32xf32, #tpu.memory_space<vmem>>, vector<32x1xf32>
    %cst_7 = arith.constant dense<0.000000e+00> : vector<32x128xf32>
    %10 = tpu.matmul %8, %7, %cst_7 {dimension_numbers = #tpu.dot_dimension_numbers<[1], [0], [0], [1], [0, 0, 1, 1], [], []>} : vector<32x32xf32>, vector<32x128xf32>, vector<32x128xf32> -> vector<32x128xf32>
    %11 = vector.broadcast %9 : vector<32x1xf32> to vector<32x128xf32>
    %12 = arith.addf %10, %11 : vector<32x128xf32>
    %cst_8 = arith.constant 0.000000e+00 : f32
    %13 = vector.broadcast %cst_8 : f32 to vector<32x128xf32>
    %14 = arith.maximumf %12, %13 : vector<32x128xf32>
    %c128 = arith.constant 128 : index
    %c0_9 = arith.constant 0 : index
    %15 = vector.load %arg2[%c128, %c0_9] : memref<336x32xf32, #tpu.memory_space<vmem>>, vector<32x32xf32>
    %c160 = arith.constant 160 : index
    %c0_10 = arith.constant 0 : index
    %16 = vector.load %arg2[%c160, %c0_10] : memref<336x32xf32, #tpu.memory_space<vmem>>, vector<32x1xf32>
    %cst_11 = arith.constant dense<0.000000e+00> : vector<32x128xf32>
    %17 = tpu.matmul %15, %14, %cst_11 {dimension_numbers = #tpu.dot_dimension_numbers<[1], [0], [0], [1], [0, 0, 1, 1], [], []>} : vector<32x32xf32>, vector<32x128xf32>, vector<32x128xf32> -> vector<32x128xf32>
    %18 = vector.broadcast %16 : vector<32x1xf32> to vector<32x128xf32>
    %19 = arith.addf %17, %18 : vector<32x128xf32>
    %cst_12 = arith.constant 0.000000e+00 : f32
    %20 = vector.broadcast %cst_12 : f32 to vector<32x128xf32>
    %21 = arith.maximumf %19, %20 : vector<32x128xf32>
    %c192 = arith.constant 192 : index
    %c0_13 = arith.constant 0 : index
    %22 = vector.load %arg2[%c192, %c0_13] : memref<336x32xf32, #tpu.memory_space<vmem>>, vector<32x32xf32>
    %c224 = arith.constant 224 : index
    %c0_14 = arith.constant 0 : index
    %23 = vector.load %arg2[%c224, %c0_14] : memref<336x32xf32, #tpu.memory_space<vmem>>, vector<32x1xf32>
    %cst_15 = arith.constant dense<0.000000e+00> : vector<32x128xf32>
    %24 = tpu.matmul %22, %21, %cst_15 {dimension_numbers = #tpu.dot_dimension_numbers<[1], [0], [0], [1], [0, 0, 1, 1], [], []>} : vector<32x32xf32>, vector<32x128xf32>, vector<32x128xf32> -> vector<32x128xf32>
    %25 = vector.broadcast %23 : vector<32x1xf32> to vector<32x128xf32>
    %26 = arith.addf %24, %25 : vector<32x128xf32>
    %cst_16 = arith.constant 0.000000e+00 : f32
    %27 = vector.broadcast %cst_16 : f32 to vector<32x128xf32>
    %28 = arith.maximumf %26, %27 : vector<32x128xf32>
    %c256 = arith.constant 256 : index
    %c0_17 = arith.constant 0 : index
    %29 = vector.load %arg2[%c256, %c0_17] : memref<336x32xf32, #tpu.memory_space<vmem>>, vector<32x32xf32>
    %c288 = arith.constant 288 : index
    %c0_18 = arith.constant 0 : index
    %30 = vector.load %arg2[%c288, %c0_18] : memref<336x32xf32, #tpu.memory_space<vmem>>, vector<32x1xf32>
    %cst_19 = arith.constant dense<0.000000e+00> : vector<32x128xf32>
    %31 = tpu.matmul %29, %28, %cst_19 {dimension_numbers = #tpu.dot_dimension_numbers<[1], [0], [0], [1], [0, 0, 1, 1], [], []>} : vector<32x32xf32>, vector<32x128xf32>, vector<32x128xf32> -> vector<32x128xf32>
    %32 = vector.broadcast %30 : vector<32x1xf32> to vector<32x128xf32>
    %33 = arith.addf %31, %32 : vector<32x128xf32>
    %cst_20 = arith.constant 0.000000e+00 : f32
    %34 = vector.broadcast %cst_20 : f32 to vector<32x128xf32>
    %35 = arith.maximumf %33, %34 : vector<32x128xf32>
    %c320 = arith.constant 320 : index
    %c0_21 = arith.constant 0 : index
    %36 = vector.load %arg2[%c320, %c0_21] : memref<336x32xf32, #tpu.memory_space<vmem>>, vector<8x32xf32>
    %c328 = arith.constant 328 : index
    %c0_22 = arith.constant 0 : index
    %37 = vector.load %arg2[%c328, %c0_22] : memref<336x32xf32, #tpu.memory_space<vmem>>, vector<8x1xf32>
    %cst_23 = arith.constant dense<0.000000e+00> : vector<8x128xf32>
    %38 = tpu.matmul %36, %35, %cst_23 {dimension_numbers = #tpu.dot_dimension_numbers<[1], [0], [0], [1], [0, 0, 1, 1], [], []>} : vector<8x32xf32>, vector<32x128xf32>, vector<8x128xf32> -> vector<8x128xf32>
    %39 = vector.broadcast %37 : vector<8x1xf32> to vector<8x128xf32>
    %40 = arith.addf %38, %39 : vector<8x128xf32>
    %c0_24 = arith.constant 0 : index
    %c0_25 = arith.constant 0 : index
    %41 = vector.load %arg3[%c0_24, %c0_25] : memref<8x128xf32, #tpu.memory_space<vmem>>, vector<8x128xf32>
    tpu.vector_store %arg3[%c0_24, %c0_25], %40 {strides = array<i32>} : memref<8x128xf32, #tpu.memory_space<vmem>>, vector<8x128xf32>,
    return
  }
  func.func @transform_0(%arg0: i32) -> (i32, i32) {
    %c0_i32 = arith.constant 0 : i32
    %c0_i32_0 = arith.constant 0 : i32
    return %c0_i32, %arg0 : i32, i32
  }
  func.func @transform_1(%arg0: i32) -> (i32, i32) {
    %c0_i32 = arith.constant 0 : i32
    %c0_i32_0 = arith.constant 0 : i32
    %c0_i32_1 = arith.constant 0 : i32
    return %c0_i32, %c0_i32_0 : i32, i32
  }
  func.func @transform_2(%arg0: i32) -> (i32, i32) {
    %c0_i32 = arith.constant 0 : i32
    %c0_i32_0 = arith.constant 0 : i32
    return %c0_i32, %arg0 : i32, i32
  }
}

</mosaic_0001>

<llo_original>
// kernel: tpu_custom_call.1
$region0: #{tpu_custom_call.1}
  #allocation0 [shape = 'u32[]', space=smem, size = 0x4, offset = 0x4, fixed_abs, tag = 'smem constant byte address 0x4 - core index']
  #allocation1 [shape = 'u32[72,128]{1,0:T(1,128)}', space=vmem, size = 0x9000, scoped, tag = 'internal scratch']
  %s0 = inlined_call_operand.vmem [shape: f32[32,128], index: 0, kind: input, shape index: {}]
  %s1 = inlined_call_operand.vmem [shape: f32[336,32], index: 1, kind: input, shape index: {}]
  %s2 = inlined_call_operand.hbm [shape: f32[8,128], index: 2, kind: output, shape index: {}]
  %s3 = sld [smem:[#allocation0]]
  $region18: #{tpu_custom_call.1} parent=0
    _
  %s5 = ssub.s32 1, %s3
  %s6 = scalar_select 0, %s5, %s3
  $region1: #{tpu_custom_call.1} parent=0
    #allocation2 [shape = 'u8[4096]{0}', space=vmem, size = 0x1000, scoped, tag = 'output window, operand 0, single buffered']
    #allocation3 [shape = 's32[1]{0}', space=sflag, size = 0x4, scoped, tag = 'scoped memory for tpu_custom_call.1']
    %7 = vsyncpa [#allocation3], 0
    // Predicated region
    $region2: #{tpu_custom_call.1} parent=1 // pred_check
      _
    $region3: #{tpu_custom_call.1} parent=1 // pred_check_branch
      %9 = sbr.rel (0) target = $region5
    $region4: #{tpu_custom_call.1} parent=1 // pred_region
      _
    $region5: #{tpu_custom_call.1} parent=1 // pred_fallthru
      _
    // Predicated region
    $region6: #{tpu_custom_call.1} parent=1 // pred_check
      _
    $region7: #{tpu_custom_call.1} parent=1 // pred_check_branch
      %11 = sbr.rel (0) target = $region9
    $region8: #{tpu_custom_call.1} parent=1 // pred_region
      _
    $region9: #{tpu_custom_call.1} parent=1 // pred_fallthru
      _
    %v12 = vld [vmem:[%s0] sm:$0xff]
    %v13 = vld [vmem:[%s0 + $0x8] sm:$0xff]
    %v14 = vld [vmem:[%s0 + $0x10] sm:$0xff]
    %v15 = vld [vmem:[%s0 + $0x18] sm:$0xff]
    %v16 = vld [vmem:[%s1] sm:$0xff]
    %v17 = vld [vmem:[%s1 + $0x8] sm:$0xff]
    %v18 = vld [vmem:[%s1 + $0x10] sm:$0xff]
    %v19 = vld [vmem:[%s1 + $0x18] sm:$0xff]
    %v20 = vld [vmem:[%s1 + $0x20] sm:$0xff]
    %v21 = vld [vmem:[%s1 + $0x28] sm:$0xff]
    %v22 = vld [vmem:[%s1 + $0x30] sm:$0xff]
    %v23 = vld [vmem:[%s1 + $0x38] sm:$0xff]
    %25 = vset.pattern.permute.xlu0 0
    %26 = vperm.xlu0 %25, %v20
    %v27 = vpop.permute.xlu0 %26
    %30 = vset.pattern.permute.xlu0 0
    %31 = vperm.xlu0 %30, %v21
    %v32 = vpop.permute.xlu0 %31
    %35 = vset.pattern.permute.xlu0 0
    %36 = vperm.xlu0 %35, %v22
    %v37 = vpop.permute.xlu0 %36
    %40 = vset.pattern.permute.xlu0 0
    %41 = vperm.xlu0 %40, %v23
    %v42 = vpop.permute.xlu0 %41
    %vm44 = vcmask 261120
    %v46 = vsel %vm44, %v16, 0
    %v49 = vsel %vm44, %v17, 0
    %v52 = vsel %vm44, %v18, 0
    %v55 = vsel %vm44, %v19, 0
    %57 = vmatpush.msra.mxu0 0.0
    %58 = vmatpush.msra.mxu0 0.0
    %59 = vmatpush.msra.mxu0 0.0
    %60 = vmatpush.msra.mxu0 0.0
    %61 = vmatpush.msra.mxu0 0.0
    %62 = vmatpush.msra.mxu0 0.0
    %63 = vmatpush.msra.mxu0 0.0
    %64 = vmatpush.msra.mxu0 0.0
    %65 = vmatpush.msra.mxu0 0.0
    %66 = vmatpush.msra.mxu0 0.0
    %67 = vmatpush.msra.mxu0 0.0
    %68 = vmatpush.msra.mxu0 0.0
    %69 = vmatpush.msra.mxu0 %v15
    %70 = vmatpush.msra.mxu0 %v14
    %71 = vmatpush.msra.mxu0 %v13
    %72 = vmatpush.msra.mxu0 %v12
    %73 = vmatmul.f32.gmra.mxu0 %v46
    %v74 = vpop.f32.mrf.mxu0
    %v75 = vadd.f32 %v27, %v74
    %76 = vmatmul.f32.gmra.mxu0 %v49
    %v77 = vpop.f32.mrf.mxu0
    %v78 = vadd.f32 %v32, %v77
    %79 = vmatmul.f32.gmra.mxu0 %v52
    %v80 = vpop.f32.mrf.mxu0
    %v81 = vadd.f32 %v37, %v80
    %82 = vmatmul.f32.gmra.mxu0 %v55
    %v83 = vpop.f32.mrf.mxu0
    %v84 = vadd.f32 %v42, %v83
    %85 = vdwg.mxu0
    %v86 = vmax.f32 %v75, 0.0
    %v87 = vmax.f32 %v78, 0.0
    %v88 = vmax.f32 %v81, 0.0
    %v89 = vmax.f32 %v84, 0.0
    %v90 = vld [vmem:[%s1 + $0x40] sm:$0xff]
    %v91 = vld [vmem:[%s1 + $0x48] sm:$0xff]
    %v92 = vld [vmem:[%s1 + $0x50] sm:$0xff]
    %v93 = vld [vmem:[%s1 + $0x58] sm:$0xff]
    %v94 = vld [vmem:[%s1 + $0x60] sm:$0xff]
    %v95 = vld [vmem:[%s1 + $0x68] sm:$0xff]
    %v96 = vld [vmem:[%s1 + $0x70] sm:$0xff]
    %v97 = vld [vmem:[%s1 + $0x78] sm:$0xff]
    %99 = vset.pattern.permute.xlu0 0
    %100 = vperm.xlu0 %99, %v94
    %v101 = vpop.permute.xlu0 %100
    %104 = vset.pattern.permute.xlu0 0
    %105 = vperm.xlu0 %104, %v95
    %v106 = vpop.permute.xlu0 %105
    %109 = vset.pattern.permute.xlu0 0
    %110 = vperm.xlu0 %109, %v96
    %v111 = vpop.permute.xlu0 %110
    %114 = vset.pattern.permute.xlu0 0
    %115 = vperm.xlu0 %114, %v97
    %v116 = vpop.permute.xlu0 %115
    %v119 = vsel %vm44, %v90, 0
    %v122 = vsel %vm44, %v91, 0
    %v125 = vsel %vm44, %v92, 0
    %v128 = vsel %vm44, %v93, 0
    %130 = vmatpush.msra.mxu0 0.0
    %131 = vmatpush.msra.mxu0 0.0
    %132 = vmatpush.msra.mxu0 0.0
    %133 = vmatpush.msra.mxu0 0.0
    %134 = vmatpush.msra.mxu0 0.0
    %135 = vmatpush.msra.mxu0 0.0
    %136 = vmatpush.msra.mxu0 0.0
    %137 = vmatpush.msra.mxu0 0.0
    %138 = vmatpush.msra.mxu0 0.0
    %139 = vmatpush.msra.mxu0 0.0
    %140 = vmatpush.msra.mxu0 0.0
    %141 = vmatpush.msra.mxu0 0.0
    %142 = vmatpush.msra.mxu0 %v89
    %143 = vmatpush.msra.mxu0 %v88
    %144 = vmatpush.msra.mxu0 %v87
    %145 = vmatpush.msra.mxu0 %v86
    %146 = vmatmul.f32.gmra.mxu0 %v119
    %v147 = vpop.f32.mrf.mxu0
    %v148 = vadd.f32 %v101, %v147
    %149 = vmatmul.f32.gmra.mxu0 %v122
    %v150 = vpop.f32.mrf.mxu0
    %v151 = vadd.f32 %v106, %v150
    %152 = vmatmul.f32.gmra.mxu0 %v125
    %v153 = vpop.f32.mrf.mxu0
    %v154 = vadd.f32 %v111, %v153
    %155 = vmatmul.f32.gmra.mxu0 %v128
    %v156 = vpop.f32.mrf.mxu0
    %v157 = vadd.f32 %v116, %v156
    %158 = vdwg.mxu0
    %v159 = vmax.f32 %v148, 0.0
    %v160 = vmax.f32 %v151, 0.0
    %v161 = vmax.f32 %v154, 0.0
    %v162 = vmax.f32 %v157, 0.0
    %v163 = vld [vmem:[%s1 + $0x80] sm:$0xff]
    %v164 = vld [vmem:[%s1 + $0x88] sm:$0xff]
    %v165 = vld [vmem:[%s1 + $0x90] sm:$0xff]
    %v166 = vld [vmem:[%s1 + $0x98] sm:$0xff]
    %v167 = vld [vmem:[%s1 + $0xa0] sm:$0xff]
    %v168 = vld [vmem:[%s1 + $0xa8] sm:$0xff]
    %v169 = vld [vmem:[%s1 + $0xb0] sm:$0xff]
    %v170 = vld [vmem:[%s1 + $0xb8] sm:$0xff]
    %172 = vset.pattern.permute.xlu0 0
    %173 = vperm.xlu0 %172, %v167
    %v174 = vpop.permute.xlu0 %173
    %177 = vset.pattern.permute.xlu0 0
    %178 = vperm.xlu0 %177, %v168
    %v179 = vpop.permute.xlu0 %178
    %182 = vset.pattern.permute.xlu0 0
    %183 = vperm.xlu0 %182, %v169
    %v184 = vpop.permute.xlu0 %183
    %187 = vset.pattern.permute.xlu0 0
    %188 = vperm.xlu0 %187, %v170
    %v189 = vpop.permute.xlu0 %188
    %v192 = vsel %vm44, %v163, 0
    %v195 = vsel %vm44, %v164, 0
    %v198 = vsel %vm44, %v165, 0
    %v201 = vsel %vm44, %v166, 0
    %203 = vmatpush.msra.mxu0 0.0
    %204 = vmatpush.msra.mxu0 0.0
    %205 = vmatpush.msra.mxu0 0.0
    %206 = vmatpush.msra.mxu0 0.0
    %207 = vmatpush.msra.mxu0 0.0
    %208 = vmatpush.msra.mxu0 0.0
    %209 = vmatpush.msra.mxu0 0.0
    %210 = vmatpush.msra.mxu0 0.0
    %211 = vmatpush.msra.mxu0 0.0
    %212 = vmatpush.msra.mxu0 0.0
    %213 = vmatpush.msra.mxu0 0.0
    %214 = vmatpush.msra.mxu0 0.0
    %215 = vmatpush.msra.mxu0 %v162
    %216 = vmatpush.msra.mxu0 %v161
    %217 = vmatpush.msra.mxu0 %v160
    %218 = vmatpush.msra.mxu0 %v159
    %219 = vmatmul.f32.gmra.mxu0 %v192
    %v220 = vpop.f32.mrf.mxu0
    %v221 = vadd.f32 %v174, %v220
    %222 = vmatmul.f32.gmra.mxu0 %v195
    %v223 = vpop.f32.mrf.mxu0
    %v224 = vadd.f32 %v179, %v223
    %225 = vmatmul.f32.gmra.mxu0 %v198
    %v226 = vpop.f32.mrf.mxu0
    %v227 = vadd.f32 %v184, %v226
    %228 = vmatmul.f32.gmra.mxu0 %v201
    %v229 = vpop.f32.mrf.mxu0
    %v230 = vadd.f32 %v189, %v229
    %231 = vdwg.mxu0
    %v232 = vmax.f32 %v221, 0.0
    %v233 = vmax.f32 %v224, 0.0
    %v234 = vmax.f32 %v227, 0.0
    %v235 = vmax.f32 %v230, 0.0
    %v236 = vld [vmem:[%s1 + $0xc0] sm:$0xff]
    %v237 = vld [vmem:[%s1 + $0xc8] sm:$0xff]
    %v238 = vld [vmem:[%s1 + $0xd0] sm:$0xff]
    %v239 = vld [vmem:[%s1 + $0xd8] sm:$0xff]
    %v240 = vld [vmem:[%s1 + $0xe0] sm:$0xff]
    %v241 = vld [vmem:[%s1 + $0xe8] sm:$0xff]
    %v242 = vld [vmem:[%s1 + $0xf0] sm:$0xff]
    %v243 = vld [vmem:[%s1 + $0xf8] sm:$0xff]
    %245 = vset.pattern.permute.xlu0 0
    %246 = vperm.xlu0 %245, %v240
    %v247 = vpop.permute.xlu0 %246
    %250 = vset.pattern.permute.xlu0 0
    %251 = vperm.xlu0 %250, %v241
    %v252 = vpop.permute.xlu0 %251
    %255 = vset.pattern.permute.xlu0 0
    %256 = vperm.xlu0 %255, %v242
    %v257 = vpop.permute.xlu0 %256
    %260 = vset.pattern.permute.xlu0 0
    %261 = vperm.xlu0 %260, %v243
    %v262 = vpop.permute.xlu0 %261
    %v265 = vsel %vm44, %v236, 0
    %v268 = vsel %vm44, %v237, 0
    %v271 = vsel %vm44, %v238, 0
    %v274 = vsel %vm44, %v239, 0
    %276 = vmatpush.msra.mxu0 0.0
    %277 = vmatpush.msra.mxu0 0.0
    %278 = vmatpush.msra.mxu0 0.0
    %279 = vmatpush.msra.mxu0 0.0
    %280 = vmatpush.msra.mxu0 0.0
    %281 = vmatpush.msra.mxu0 0.0
    %282 = vmatpush.msra.mxu0 0.0
    %283 = vmatpush.msra.mxu0 0.0
    %284 = vmatpush.msra.mxu0 0.0
    %285 = vmatpush.msra.mxu0 0.0
    %286 = vmatpush.msra.mxu0 0.0
    %287 = vmatpush.msra.mxu0 0.0
    %288 = vmatpush.msra.mxu0 %v235
    %289 = vmatpush.msra.mxu0 %v234
    %290 = vmatpush.msra.mxu0 %v233
    %291 = vmatpush.msra.mxu0 %v232
    %292 = vmatmul.f32.gmra.mxu0 %v265
    %v293 = vpop.f32.mrf.mxu0
    %v294 = vadd.f32 %v247, %v293
    %295 = vmatmul.f32.gmra.mxu0 %v268
    %v296 = vpop.f32.mrf.mxu0
    %v297 = vadd.f32 %v252, %v296
    %298 = vmatmul.f32.gmra.mxu0 %v271
    %v299 = vpop.f32.mrf.mxu0
    %v300 = vadd.f32 %v257, %v299
    %301 = vmatmul.f32.gmra.mxu0 %v274
    %v302 = vpop.f32.mrf.mxu0
    %v303 = vadd.f32 %v262, %v302
    %304 = vdwg.mxu0
    %v305 = vmax.f32 %v294, 0.0
    %v306 = vmax.f32 %v297, 0.0
    %v307 = vmax.f32 %v300, 0.0
    %v308 = vmax.f32 %v303, 0.0
    %v309 = vld [vmem:[%s1 + $0x100] sm:$0xff]
    %v310 = vld [vmem:[%s1 + $0x108] sm:$0xff]
    %v311 = vld [vmem:[%s1 + $0x110] sm:$0xff]
    %v312 = vld [vmem:[%s1 + $0x118] sm:$0xff]
    %v313 = vld [vmem:[%s1 + $0x120] sm:$0xff]
    %v314 = vld [vmem:[%s1 + $0x128] sm:$0xff]
    %v315 = vld [vmem:[%s1 + $0x130] sm:$0xff]
    %v316 = vld [vmem:[%s1 + $0x138] sm:$0xff]
    %318 = vset.pattern.permute.xlu0 0
    %319 = vperm.xlu0 %318, %v313
    %v320 = vpop.permute.xlu0 %319
    %323 = vset.pattern.permute.xlu0 0
    %324 = vperm.xlu0 %323, %v314
    %v325 = vpop.permute.xlu0 %324
    %328 = vset.pattern.permute.xlu0 0
    %329 = vperm.xlu0 %328, %v315
    %v330 = vpop.permute.xlu0 %329
    %333 = vset.pattern.permute.xlu0 0
    %334 = vperm.xlu0 %333, %v316
    %v335 = vpop.permute.xlu0 %334
    %v338 = vsel %vm44, %v309, 0
    %v341 = vsel %vm44, %v310, 0
    %v344 = vsel %vm44, %v311, 0
    %v347 = vsel %vm44, %v312, 0
    %349 = vmatpush.msra.mxu0 0.0
    %350 = vmatpush.msra.mxu0 0.0
    %351 = vmatpush.msra.mxu0 0.0
    %352 = vmatpush.msra.mxu0 0.0
    %353 = vmatpush.msra.mxu0 0.0
    %354 = vmatpush.msra.mxu0 0.0
    %355 = vmatpush.msra.mxu0 0.0
    %356 = vmatpush.msra.mxu0 0.0
    %357 = vmatpush.msra.mxu0 0.0
    %358 = vmatpush.msra.mxu0 0.0
    %359 = vmatpush.msra.mxu0 0.0
    %360 = vmatpush.msra.mxu0 0.0
    %361 = vmatpush.msra.mxu0 %v308
    %362 = vmatpush.msra.mxu0 %v307
    %363 = vmatpush.msra.mxu0 %v306
    %364 = vmatpush.msra.mxu0 %v305
    %365 = vmatmul.f32.gmra.mxu0 %v338
    %v366 = vpop.f32.mrf.mxu0
    %v367 = vadd.f32 %v320, %v366
    %368 = vmatmul.f32.gmra.mxu0 %v341
    %v369 = vpop.f32.mrf.mxu0
    %v370 = vadd.f32 %v325, %v369
    %371 = vmatmul.f32.gmra.mxu0 %v344
    %v372 = vpop.f32.mrf.mxu0
    %v373 = vadd.f32 %v330, %v372
    %374 = vmatmul.f32.gmra.mxu0 %v347
    %v375 = vpop.f32.mrf.mxu0
    %v376 = vadd.f32 %v335, %v375
    %377 = vdwg.mxu0
    %v378 = vmax.f32 %v367, 0.0
    %v379 = vmax.f32 %v370, 0.0
    %v380 = vmax.f32 %v373, 0.0
    %v381 = vmax.f32 %v376, 0.0
    %v382 = vld [vmem:[%s1 + $0x140] sm:$0xff]
    %v383 = vld [vmem:[%s1 + $0x148] sm:$0xff]
    %385 = vset.pattern.permute.xlu0 0
    %386 = vperm.xlu0 %385, %v383
    %v387 = vpop.permute.xlu0 %386
    %v390 = vsel %vm44, %v382, 0
    %392 = vmatpush.msra.mxu0 0.0
    %393 = vmatpush.msra.mxu0 0.0
    %394 = vmatpush.msra.mxu0 0.0
    %395 = vmatpush.msra.mxu0 0.0
    %396 = vmatpush.msra.mxu0 0.0
    %397 = vmatpush.msra.mxu0 0.0
    %398 = vmatpush.msra.mxu0 0.0
    %399 = vmatpush.msra.mxu0 0.0
    %400 = vmatpush.msra.mxu0 0.0
    %401 = vmatpush.msra.mxu0 0.0
    %402 = vmatpush.msra.mxu0 0.0
    %403 = vmatpush.msra.mxu0 0.0
    %404 = vmatpush.msra.mxu0 %v381
    %405 = vmatpush.msra.mxu0 %v380
    %406 = vmatpush.msra.mxu0 %v379
    %407 = vmatpush.msra.mxu0 %v378
    %408 = vmatmul.f32.gmra.mxu0 %v390
    %v409 = vpop.f32.mrf.mxu0
    %v410 = vadd.f32 %v387, %v409
    %411 = vdwg.mxu0
    %412 = vst [vmem:[#allocation2] sm:$0xff] %v410
    // Predicated region
    $region10: #{tpu_custom_call.1} parent=1 // pred_check
      _
    $region11: #{tpu_custom_call.1} parent=1 // pred_check_branch
      %414 = sbr.rel (0) target = $region13
    $region12: #{tpu_custom_call.1} parent=1 // pred_region
      %416 = vsyncadd [#allocation3], 0
      %s418 = sshll.u32 [#allocation2], 4
      %s419 = int_to_ptr.vmem [resolvable:$true] %s418
      %s420 = sshll.u32 %s2, 4
      %s421 = int_to_ptr.hbm [resolvable:$true] %s420
      %423 = dma.vmem_to_hbm [thread:$0]  %s419, 128, %s421, [#allocation3]
    $region13: #{tpu_custom_call.1} parent=1 // pred_fallthru
      _
    // Predicated region
    $region14: #{tpu_custom_call.1} parent=1 // pred_check
      _
    $region15: #{tpu_custom_call.1} parent=1 // pred_check_branch
      %425 = sbr.rel (0) target = $region17
    $region16: #{tpu_custom_call.1} parent=1 // pred_region
      %427 = dma.done [#allocation3], 128
    $region17: #{tpu_custom_call.1} parent=1 // pred_fallthru
      _
    %428 = vsyncpa [#allocation3], 1

</llo_original>
